<compile_context>
chip_gen: v6e
topology: v6e:2x2x1
jax: 0.10.0
libtpu: 0.0.40
codegen_flags: <defaults>
</compile_context>

<pallas_src>
import functools

import jax
import jax.numpy as jnp
from jax.experimental import pallas as pl
from jax.experimental.pallas import tpu as pltpu

LANE = 128
SUBLANE = 8


def _round_up(x, m):
    return (x + m - 1) // m * m


def mlp_kernel(x_ref, w_ref, b_ref, o_ref, *, k0, dp):
    # x_ref: (TB, k0) bf16, last real column of the first d0+1 is the ones-column (bias fold)
    # w_ref: (k0 + 2*dp, dp) bf16 slab = [W0|b0 ; W1 ; W2], zero padded
    # b_ref: (2, dp) f32 = [b1 ; b2], zero padded
    # o_ref: (TB, dp) f32, lane-dense; wrapper slices the valid d3 columns
    z0 = x_ref[...]
    s1 = jnp.dot(z0, w_ref[:k0, :], preferred_element_type=jnp.float32)       # bias folded
    z1 = jnp.maximum(s1, 0.0).astype(jnp.bfloat16)
    s2 = jnp.dot(z1, w_ref[k0:k0 + dp, :],
                 preferred_element_type=jnp.float32) + b_ref[0:1, :]
    z2 = jnp.maximum(s2, 0.0).astype(jnp.bfloat16)
    s3 = jnp.dot(z2, w_ref[k0 + dp:k0 + 2 * dp, :],
                 preferred_element_type=jnp.float32) + b_ref[1:2, :]
    o_ref[...] = s3


def pack_params(params, d0):
    """One-time host-side packing: fold b0 into W0, pad to lane-friendly dims, cast to bf16."""
    (w0, b0), (w1, b1), (w2, b2) = params
    d1, d2, d3 = w0.shape[1], w1.shape[1], w2.shape[1]
    k0 = _round_up(d0 + 1, LANE)                    # +1 for the ones/bias column
    dp = _round_up(max(d1, d2, d3), LANE)           # single lane-dense hidden width

    w0a = (jnp.zeros((k0, dp), jnp.float32)
           .at[:d0, :d1].set(w0)
           .at[d0, :d1].set(b0))                    # bias b0 folded into row d0
    w1p = jnp.zeros((dp, dp), jnp.float32).at[:d1, :d2].set(w1)
    w2p = jnp.zeros((dp, dp), jnp.float32).at[:d2, :d3].set(w2)
    w_all = jnp.concatenate([w0a, w1p, w2p], axis=0).astype(jnp.bfloat16)

    b_all = (jnp.zeros((2, dp), jnp.float32)
             .at[0, :d2].set(b1)
             .at[1, :d3].set(b2))
    return w_all, b_all, (d0, d1, d2, d3, k0, dp)


def mynet_forward(x, packed, *, block_b=256):
    """x: (C,H,W) -> (d3,)  [original MyNet.forward semantics]
       x: (B,C,H,W) -> (B, d3)  [batched]."""
    w_all, b_all, (d0, d1, d2, d3, k0, dp) = packed

    single = (x.ndim == 3)
    xb = x[None] if single else x
    bsz = xb.shape[0]
    z0 = xb.reshape(bsz, d0)                         # torch .view(-1) per example

    # Batch tile: multiple of 8 sublanes; 256 rows fills the v6e/v7x MXU, 128 fills v5e.
    tb = max(SUBLANE, _round_up(min(block_b, bsz), SUBLANE))
    bp = _round_up(bsz, tb)
    nb = pl.cdiv(bp, tb)

    # Pad batch + features, append ones-column for the folded b0, cast to bf16 for the MXU.
    x_aug = (jnp.zeros((bp, k0), jnp.float32)
             .at[:bsz, :d0].set(z0)
             .at[:bsz, d0].set(1.0)
             .astype(jnp.bfloat16))

    out = pl.pallas_call(
        functools.partial(mlp_kernel, k0=k0, dp=dp),
        out_shape=jax.ShapeDtypeStruct((bp, dp), jnp.float32),
        grid=(nb,),
        in_specs=[
            pl.BlockSpec((tb, k0), lambda i: (i, 0)),        # batch tile of activations
            pl.BlockSpec(w_all.shape, lambda i: (0, 0)),     # resident weight slab (DMA'd once)
            pl.BlockSpec(b_all.shape, lambda i: (0, 0)),     # resident bias slab
        ],
        out_specs=pl.BlockSpec((tb, dp), lambda i: (i, 0)),
        compiler_params=pltpu.CompilerParams(
            dimension_semantics=("parallel",)),              # shard batch tiles across TCs
    )(x_aug, w_all, b_all)

    y = out[:bsz, :d3]
    return y[0] if single else y


def init_linear(key, fan_in, fan_out):
    # Mimics nn.Linear's uniform(-1/sqrt(fan_in), +1/sqrt(fan_in)) init.
    kw, kb = jax.random.split(key)
    bound = 1.0 / jnp.sqrt(jnp.float32(fan_in))
    w = jax.random.uniform(kw, (fan_in, fan_out), jnp.float32, -bound, bound)
    b = jax.random.uniform(kb, (fan_out,), jnp.float32, -bound, bound)
    return w, b


def _ref_forward_f32(xb, params, d0):
    (w0, b0), (w1, b1), (w2, b2) = params
    z0 = xb.reshape(xb.shape[0], d0)
    z1 = jnp.maximum(z0 @ w0 + b0, 0.0)
    z2 = jnp.maximum(z1 @ w1 + b1, 0.0)
    return z2 @ w2 + b2


def _ref_forward_bf16(xb, params, d0):
    # Same bf16-operand / f32-accumulate arithmetic the kernel uses.
    bf = jnp.bfloat16
    (w0, b0), (w1, b1), (w2, b2) = params
    z0 = xb.reshape(xb.shape[0], d0).astype(bf)
    s1 = jnp.dot(z0, w0.astype(bf), preferred_element_type=jnp.float32) \
        + b0.astype(bf).astype(jnp.float32)
    z1 = jnp.maximum(s1, 0.0).astype(bf)
    s2 = jnp.dot(z1, w1.astype(bf), preferred_element_type=jnp.float32) + b1
    z2 = jnp.maximum(s2, 0.0).astype(bf)
    return jnp.dot(z2, w2.astype(bf), preferred_element_type=jnp.float32) + b2


if __name__ == "__main__":
    key = jax.random.PRNGKey(0)
    k_img, k0k, k1k, k2k = jax.random.split(key, 4)

    # image = torch.rand(3, 10, 20); d0 = image.nelement() = 600
    C, H, W = 3, 10, 20
    d0 = C * H * W
    d1, d2, d3 = 128, 64, 10
    B = 16                                   # small batch to exercise the grid (2 tiles of 8)

    params = (
        init_linear(k0k, d0, d1),
        init_linear(k1k, d1, d2),
        init_linear(k2k, d2, d3),
    )
    packed = pack_params(params, d0)

    images = jax.random.uniform(k_img, (B, C, H, W), jnp.float32)

    # Batched path.
    y = mynet_forward(images, packed, block_b=8)
    jax.block_until_ready(y)
    assert y.shape == (B, d3) and y.dtype == jnp.float32

    # Single-image path matching the original MyNet.forward signature.
    y1 = mynet_forward(images[0], packed)
    jax.block_until_ready(y1)
    assert y1.shape == (d3,) and y1.dtype == jnp.float32

    # Correctness: exact (bf16-consistent) reference + loose check vs pure-f32 semantics.
    ref_bf = _ref_forward_bf16(images, params, d0)
    ref_32 = _ref_forward_f32(images, params, d0)
    assert jnp.allclose(y, ref_bf, atol=1e-3, rtol=1e-3)
    assert jnp.allclose(y, ref_32, atol=2e-2, rtol=2e-2)
    assert jnp.allclose(y1, y[0], atol=1e-5, rtol=1e-5)

    print("KERNEL_OK")
</pallas_src>

<mosaic_0001>
module attributes {stable_mosaic.version = 11 : i64} {
  func.func @mlp_kernel(%arg0: i32, %arg1: memref<8x640xbf16, #tpu.memory_space<vmem>>, %arg2: memref<896x128xbf16, #tpu.memory_space<vmem>>, %arg3: memref<2x128xf32, #tpu.memory_space<vmem>>, %arg4: memref<8x128xf32, #tpu.memory_space<vmem>>) attributes {dimension_semantics = [#tpu.dimension_semantics<parallel>], iteration_bounds = array<i64: 2>, scalar_prefetch = 0 : i64, scratch_operands = 0 : i64, tpu.core_type = #tpu.core_type<tc>, window_params = [{transform_indices = @transform_0, window_bounds = array<i64: 8, 640>}, {pipeline_mode = #tpu.pipeline_mode<synchronous>, transform_indices = @transform_1, window_bounds = array<i64: 896, 128>}, {pipeline_mode = #tpu.pipeline_mode<synchronous>, transform_indices = @transform_2, window_bounds = array<i64: 2, 128>}, {transform_indices = @transform_3, window_bounds = array<i64: 8, 128>}]} {
    %c0 = arith.constant 0 : index
    %c0_0 = arith.constant 0 : index
    %0 = vector.load %arg1[%c0, %c0_0] : memref<8x640xbf16, #tpu.memory_space<vmem>>, vector<8x640xbf16>
    %c0_1 = arith.constant 0 : index
    %c0_2 = arith.constant 0 : index
    %1 = vector.load %arg2[%c0_1, %c0_2] : memref<896x128xbf16, #tpu.memory_space<vmem>>, vector<640x128xbf16>
    %cst = arith.constant dense<0.000000e+00> : vector<8x128xf32>
    %2 = tpu.matmul %0, %1, %cst {dimension_numbers = #tpu.dot_dimension_numbers<[1], [0], [0], [1], [0, 0, 1, 1], [], []>} : vector<8x640xbf16>, vector<640x128xbf16>, vector<8x128xf32> -> vector<8x128xf32>
    %cst_3 = arith.constant 0.000000e+00 : f32
    %3 = vector.broadcast %cst_3 : f32 to vector<8x128xf32>
    %4 = arith.maximumf %2, %3 : vector<8x128xf32>
    %5 = arith.truncf %4 : vector<8x128xf32> to vector<8x128xbf16>
    %c640 = arith.constant 640 : index
    %c0_4 = arith.constant 0 : index
    %6 = vector.load %arg2[%c640, %c0_4] : memref<896x128xbf16, #tpu.memory_space<vmem>>, vector<128x128xbf16>
    %cst_5 = arith.constant dense<0.000000e+00> : vector<8x128xf32>
    %7 = tpu.matmul %5, %6, %cst_5 {dimension_numbers = #tpu.dot_dimension_numbers<[1], [0], [0], [1], [0, 0, 1, 1], [], []>} : vector<8x128xbf16>, vector<128x128xbf16>, vector<8x128xf32> -> vector<8x128xf32>
    %c0_6 = arith.constant 0 : index
    %c0_7 = arith.constant 0 : index
    %8 = vector.load %arg3[%c0_6, %c0_7] : memref<2x128xf32, #tpu.memory_space<vmem>>, vector<1x128xf32>
    %9 = vector.broadcast %8 : vector<1x128xf32> to vector<8x128xf32>
    %10 = arith.addf %7, %9 : vector<8x128xf32>
    %cst_8 = arith.constant 0.000000e+00 : f32
    %11 = vector.broadcast %cst_8 : f32 to vector<8x128xf32>
    %12 = arith.maximumf %10, %11 : vector<8x128xf32>
    %13 = arith.truncf %12 : vector<8x128xf32> to vector<8x128xbf16>
    %c768 = arith.constant 768 : index
    %c0_9 = arith.constant 0 : index
    %14 = vector.load %arg2[%c768, %c0_9] : memref<896x128xbf16, #tpu.memory_space<vmem>>, vector<128x128xbf16>
    %cst_10 = arith.constant dense<0.000000e+00> : vector<8x128xf32>
    %15 = tpu.matmul %13, %14, %cst_10 {dimension_numbers = #tpu.dot_dimension_numbers<[1], [0], [0], [1], [0, 0, 1, 1], [], []>} : vector<8x128xbf16>, vector<128x128xbf16>, vector<8x128xf32> -> vector<8x128xf32>
    %c1 = arith.constant 1 : index
    %c0_11 = arith.constant 0 : index
    %16 = vector.load %arg3[%c1, %c0_11] : memref<2x128xf32, #tpu.memory_space<vmem>>, vector<1x128xf32>
    %17 = vector.broadcast %16 : vector<1x128xf32> to vector<8x128xf32>
    %18 = arith.addf %15, %17 : vector<8x128xf32>
    %c0_12 = arith.constant 0 : index
    %c0_13 = arith.constant 0 : index
    %19 = vector.load %arg4[%c0_12, %c0_13] : memref<8x128xf32, #tpu.memory_space<vmem>>, vector<8x128xf32>
    tpu.vector_store %arg4[%c0_12, %c0_13], %18 {strides = array<i32>} : memref<8x128xf32, #tpu.memory_space<vmem>>, vector<8x128xf32>,
    return
  }
  func.func @transform_0(%arg0: i32) -> (i32, i32) {
    %c0_i32 = arith.constant 0 : i32
    %c0_i32_0 = arith.constant 0 : i32
    return %arg0, %c0_i32 : i32, i32
  }
  func.func @transform_1(%arg0: i32) -> (i32, i32) {
    %c0_i32 = arith.constant 0 : i32
    %c0_i32_0 = arith.constant 0 : i32
    %c0_i32_1 = arith.constant 0 : i32
    return %c0_i32, %c0_i32_0 : i32, i32
  }
  func.func @transform_2(%arg0: i32) -> (i32, i32) {
    %c0_i32 = arith.constant 0 : i32
    %c0_i32_0 = arith.constant 0 : i32
    %c0_i32_1 = arith.constant 0 : i32
    return %c0_i32, %c0_i32_0 : i32, i32
  }
  func.func @transform_3(%arg0: i32) -> (i32, i32) {
    %c0_i32 = arith.constant 0 : i32
    %c0_i32_0 = arith.constant 0 : i32
    return %arg0, %c0_i32 : i32, i32
  }
}

</mosaic_0001>

<llo_original>
// kernel: tpu_custom_call.1
$region0: #{tpu_custom_call.1}
  #allocation0 [shape = 'u32[]', space=smem, size = 0x4, offset = 0x4, fixed_abs, tag = 'smem constant byte address 0x4 - core index']
  #allocation1 [shape = 'u32[144,128]{1,0:T(1,128)}', space=vmem, size = 0x12000, scoped, tag = 'internal scratch']
  %s0 = inlined_call_operand.hbm [shape: bf16[16,640], index: 0, kind: input, shape index: {}]
  %s1 = inlined_call_operand.hbm [shape: bf16[896,128], index: 1, kind: input, shape index: {}]
  %s2 = inlined_call_operand.vmem [shape: f32[2,128], index: 2, kind: input, shape index: {}]
  %s3 = inlined_call_operand.hbm [shape: f32[16,128], index: 3, kind: output, shape index: {}]
  %s4 = sld [smem:[#allocation0]]
  $region53: #{tpu_custom_call.1} parent=0
    _
  %s6 = ssub.s32 1, %s4
  %s7 = scalar_select 0, %s6, %s4
  $region1: #{tpu_custom_call.1} parent=0
    #allocation2 [shape = 'u8[20480]{0}', space=vmem, size = 0x5000, scoped, tag = 'input window, operand 0']
    #allocation3 [shape = 's32[2]{0}', space=sflag, size = 0x8, scoped, tag = 'scoped memory for tpu_custom_call.1']
    #allocation4 [shape = 's32[2]{0}', space=sflag, size = 0x8, scoped, tag = 'scoped memory for tpu_custom_call.1']
    #allocation5 [shape = 'u8[229376]{0}', space=vmem, size = 0x38000, scoped, tag = 'input window, operand 1, single buffered']
    #allocation6 [shape = 's32[1]{0}', space=sflag, size = 0x4, scoped, tag = 'scoped memory for tpu_custom_call.1']
    #allocation7 [shape = 'u8[8192]{0}', space=vmem, size = 0x2000, scoped, tag = 'output window, operand 0']
    %8 = vsyncpa [#allocation3], 0
    %s9 = scalar_lea.sflag [#allocation3], 1
    %10 = vsyncpa %s9, 0
    %11 = vsyncpa [#allocation6], 0
    %12 = vsyncpa [#allocation4], 0
    %s13 = scalar_lea.sflag [#allocation4], 1
    %14 = vsyncpa %s13, 0
    loop: start=0, step=1, limit=4
    $region2: #{tpu_custom_call.1} parent=1 // loop_pre_header
      _
    $region3: #{tpu_custom_call.1} parent=1 // loop_header
      %s16 = sphi 0, %s20
      %p17 = scmp.ge.s32.totalorder %s16, 4
      %s26 = sphi 0, %s28
      %s29 = sphi 0, %s26
      %s30 = sphi 0, %s29
      %s46 = sphi 0, %s30
      %s50 = sphi 0, %s50
      %s52 = sphi 0, %s50
      %s53 = sphi 0, %s52
      %s67 = sphi 0, %s53
      %s71 = sphi 0, %s71
      %s73 = sphi 0, %s71
      %s74 = sphi 0, %s73
      %s88 = sphi 0, %s74
      %s94 = sphi 0, %s96
      %s97 = sphi 0, %s94
      %s98 = sphi 0, %s97
      %s114 = sphi 0, %s98
    $region4: #{tpu_custom_call.1} parent=1 // loop_header_branch
      %19 = sbr.rel (%p17) target = $region8
    $region5: #{tpu_custom_call.1} parent=1 // loop_body
      %s21 = ssub.s32 %s16, 1
      %s22 = ssub.s32 %s16, 2
      %s23 = sadd.s32 %s16, 1
      %s24 = ssub.s32 %s16, %s23
      %p25 = scmp.eq.s32.totalorder %s24, 0
      %s27 = sadd.s32 %s26, 1
      %s28 = scalar_select %p25, %s26, %s27
      %p31 = pneg %p25
      %p32 = scmp.eq.s32.totalorder %s16, 1
      %p33 = por %p31, %p32
      %p34 = scmp.ne.s32.totalorder %s26, %s29
      %p35 = scmp.eq.s32.totalorder %s16, 0
      %p36 = por %p34, %p35
      %p37 = scmp.ne.s32.totalorder %s26, %s29
      %p38 = scmp.eq.s32.totalorder %s21, 1
      %p39 = por %p37, %p38
      %p40 = scmp.ne.s32.totalorder %s29, %s30
      %p41 = scmp.eq.s32.totalorder %s21, 0
      %p42 = por %p40, %p41
      %p43 = scmp.ne.s32.totalorder %s29, %s30
      %p44 = scmp.eq.s32.totalorder %s22, 1
      %p45 = por %p43, %p44
      %p47 = scmp.ne.s32.totalorder %s30, %s46
      %p48 = scmp.eq.s32.totalorder %s22, 0
      %p49 = por %p47, %p48
      %s51 = sadd.s32 %s50, 1
      %p54 = scmp.eq.s32.totalorder %s16, 1
      %p55 = scmp.ne.s32.totalorder %s50, %s52
      %p56 = scmp.eq.s32.totalorder %s16, 0
      %p57 = por %p55, %p56
      %p58 = scmp.ne.s32.totalorder %s50, %s52
      %p59 = scmp.eq.s32.totalorder %s21, 1
      %p60 = por %p58, %p59
      %p61 = scmp.ne.s32.totalorder %s52, %s53
      %p62 = scmp.eq.s32.totalorder %s21, 0
      %p63 = por %p61, %p62
      %p64 = scmp.ne.s32.totalorder %s52, %s53
      %p65 = scmp.eq.s32.totalorder %s22, 1
      %p66 = por %p64, %p65
      %p68 = scmp.ne.s32.totalorder %s53, %s67
      %p69 = scmp.eq.s32.totalorder %s22, 0
      %p70 = por %p68, %p69
      %s72 = sadd.s32 %s71, 1
      %p75 = scmp.eq.s32.totalorder %s16, 1
      %p76 = scmp.ne.s32.totalorder %s71, %s73
      %p77 = scmp.eq.s32.totalorder %s16, 0
      %p78 = por %p76, %p77
      %p79 = scmp.ne.s32.totalorder %s71, %s73
      %p80 = scmp.eq.s32.totalorder %s21, 1
      %p81 = por %p79, %p80
      %p82 = scmp.ne.s32.totalorder %s73, %s74
      %p83 = scmp.eq.s32.totalorder %s21, 0
      %p84 = por %p82, %p83
      %p85 = scmp.ne.s32.totalorder %s73, %s74
      %p86 = scmp.eq.s32.totalorder %s22, 1
      %p87 = por %p85, %p86
      %p89 = scmp.ne.s32.totalorder %s74, %s88
      %p90 = scmp.eq.s32.totalorder %s22, 0
      %p91 = por %p89, %p90
      %s92 = ssub.s32 %s16, %s23
      %p93 = scmp.eq.s32.totalorder %s92, 0
      %s95 = sadd.s32 %s94, 1
      %s96 = scalar_select %p93, %s94, %s95
      %p99 = pneg %p93
      %p100 = scmp.eq.s32.totalorder %s16, 1
      %p101 = por %p99, %p100
      %p102 = scmp.ne.s32.totalorder %s94, %s97
      %p103 = scmp.eq.s32.totalorder %s16, 0
      %p104 = por %p102, %p103
      %p105 = scmp.ne.s32.totalorder %s94, %s97
      %p106 = scmp.eq.s32.totalorder %s21, 1
      %p107 = por %p105, %p106
      %p108 = scmp.ne.s32.totalorder %s97, %s98
      %p109 = scmp.eq.s32.totalorder %s21, 0
      %p110 = por %p108, %p109
      %p111 = scmp.ne.s32.totalorder %s97, %s98
      %p112 = scmp.eq.s32.totalorder %s22, 1
      %p113 = por %p111, %p112
      %p115 = scmp.ne.s32.totalorder %s98, %s114
      %p116 = scmp.eq.s32.totalorder %s22, 0
      %p117 = por %p115, %p116
      %p118 = scmp.le.s32.totalorder 1, %s16
      %p119 = scmp.lt.s32.totalorder %s16, 3
      %p120 = pnand %p118, %p119
      %p121 = pneg %p120
      // Predicated region
      $region9: #{tpu_custom_call.1} parent=5 // pred_check
        _
      $region10: #{tpu_custom_call.1} parent=5 // pred_check_branch
        %123 = sbr.rel (%p120) target = $region12
      $region11: #{tpu_custom_call.1} parent=5 // pred_region
        %s124 = ssub.s32 %s16, 1
        // Predicated region
        $region13: #{tpu_custom_call.1} parent=11 // pred_check
          %p125 = pneg %p63
        $region14: #{tpu_custom_call.1} parent=11 // pred_check_branch
          %127 = sbr.rel (%p125) target = $region16
        $region15: #{tpu_custom_call.1} parent=11 // pred_region
          %s129 = ssub.s32 7168, 7168
          %130 = vsyncadd [#allocation6], %s129
          %s131 = sshll.u32 [#allocation5], 4
          %s132 = int_to_ptr.vmem [resolvable:$true] %s131
          %137 = dma.hbm_to_vmem [thread:$0]  %s1, 7168, %s132, [#allocation6], 64, 64, 4
        $region16: #{tpu_custom_call.1} parent=11 // pred_fallthru
          _
        // Predicated region
        $region17: #{tpu_custom_call.1} parent=11 // pred_check
          %p138 = pneg %p84
        $region18: #{tpu_custom_call.1} parent=11 // pred_check_branch
          %140 = sbr.rel (%p138) target = $region20
        $region19: #{tpu_custom_call.1} parent=11 // pred_region
          _
        $region20: #{tpu_custom_call.1} parent=11 // pred_fallthru
          _
      $region12: #{tpu_custom_call.1} parent=5 // pred_fallthru
        _
      %p141 = scmp.lt.s32.totalorder %s16, 2
      // Predicated region
      $region21: #{tpu_custom_call.1} parent=5 // pred_check
        %p142 = pneg %p141
      $region22: #{tpu_custom_call.1} parent=5 // pred_check_branch
        %144 = sbr.rel (%p142) target = $region24
      $region23: #{tpu_custom_call.1} parent=5 // pred_region
        // Predicated region
        $region25: #{tpu_custom_call.1} parent=23 // pred_check
          %p145 = pneg %p36
        $region26: #{tpu_custom_call.1} parent=23 // pred_check_branch
          %147 = sbr.rel (%p145) target = $region28
        $region27: #{tpu_custom_call.1} parent=23 // pred_region
          %s148 = sand.u32 %s26, 1
          %s149 = scalar_lea.sflag [#allocation3], %s148
          %s150 = sand.u32 %s26, 1
          %s151 = smul.addr %s150, 20
          %s152 = scalar_lea.vmem [#allocation2], %s151
          %s154 = ssub.s32 320, 320
          %155 = vsyncadd %s149, %s154
          %s156 = smul.addr %s16, 5
          %s157 = smul.addr %s156, 64
          %s158 = scalar_lea.hbm %s0, %s157
          %s160 = sshll.u32 %s152, 4
          %s161 = int_to_ptr.vmem [resolvable:$true] %s160
          %163 = dma.hbm_to_vmem [thread:$0]  %s158, 320, %s161, %s149
        $region28: #{tpu_custom_call.1} parent=23 // pred_fallthru
          _
      $region24: #{tpu_custom_call.1} parent=5 // pred_fallthru
        _
      %p164 = scmp.le.s32.totalorder 1, %s16
      %p165 = scmp.lt.s32.totalorder %s16, 3
      %p166 = pnand %p164, %p165
      %p167 = pneg %p166
      // Predicated region
      $region29: #{tpu_custom_call.1} parent=5 // pred_check
        _
      $region30: #{tpu_custom_call.1} parent=5 // pred_check_branch
        %169 = sbr.rel (%p166) target = $region32
      $region31: #{tpu_custom_call.1} parent=5 // pred_region
        %s170 = ssub.s32 %s16, 1
        %s171 = sand.u32 %s29, 1
        %s172 = scalar_lea.sflag [#allocation3], %s171
        %s173 = sand.u32 %s29, 1
        %s174 = smul.addr %s173, 20
        %s175 = scalar_lea.vmem [#allocation2], %s174
        // Predicated region
        $region33: #{tpu_custom_call.1} parent=31 // pred_check
          %p176 = pneg %p42
        $region34: #{tpu_custom_call.1} parent=31 // pred_check_branch
          %178 = sbr.rel (%p176) target = $region36
        $region35: #{tpu_custom_call.1} parent=31 // pred_region
          %179 = dma.done %s172, 320
        $region36: #{tpu_custom_call.1} parent=31 // pred_fallthru
          _
        // Predicated region
        $region37: #{tpu_custom_call.1} parent=31 // pred_check
          %p180 = pneg %p63
        $region38: #{tpu_custom_call.1} parent=31 // pred_check_branch
          %182 = sbr.rel (%p180) target = $region40
        $region39: #{tpu_custom_call.1} parent=31 // pred_region
          %183 = dma.done [#allocation6], 7168
        $region40: #{tpu_custom_call.1} parent=31 // pred_fallthru
          _
        %s184 = sand.u32 %s29, 1
        %s185 = scalar_lea.sflag [#allocation3], %s184
        %s186 = sand.u32 %s29, 1
        %s187 = smul.addr %s186, 20
        %s188 = scalar_lea.vmem [#allocation2], %s187
        %p189 = pneg %p42
        %p190 = pneg %p39
        %p191 = pneg %p63
        %p192 = pneg %p60
        %p193 = pneg %p84
        %p194 = pneg %p81
        %p195 = pneg %p110
        %p196 = pneg %p107
        %s197 = sand.u32 %s97, 1
        %s198 = scalar_lea.sflag [#allocation4], %s197
        %s199 = sand.u32 %s97, 1
        %s200 = smul.addr %s199, 8
        %s201 = scalar_lea.vmem [#allocation7], %s200
        %v203 = vld [vmem:[%s175] sm:$0xff]
        %v204 = vld [vmem:[%s175 + $0x8] sm:$0xff]
        %v205 = vld [vmem:[%s175 + $0x10] sm:$0xf]
        %v206 = vld [vmem:[#allocation5] sm:$0xf]
        %v207 = vld [vmem:[#allocation5 + $0x4] sm:$0xf]
        %v208 = vld [vmem:[#allocation5 + $0x8] sm:$0xf]
        %v209 = vld [vmem:[#allocation5 + $0xc] sm:$0xf]
        %v210 = vld [vmem:[#allocation5 + $0x10] sm:$0xf]
        %v211 = vld [vmem:[#allocation5 + $0x14] sm:$0xf]
        %v212 = vld [vmem:[#allocation5 + $0x18] sm:$0xf]
        %v213 = vld [vmem:[#allocation5 + $0x1c] sm:$0xf]
        %v214 = vld [vmem:[#allocation5 + $0x20] sm:$0xf]
        %v215 = vld [vmem:[#allocation5 + $0x24] sm:$0xf]
        %v216 = vld [vmem:[#allocation5 + $0x28] sm:$0xf]
        %v217 = vld [vmem:[#allocation5 + $0x2c] sm:$0xf]
        %v218 = vld [vmem:[#allocation5 + $0x30] sm:$0xf]
        %v219 = vld [vmem:[#allocation5 + $0x34] sm:$0xf]
        %v220 = vld [vmem:[#allocation5 + $0x38] sm:$0xf]
        %v221 = vld [vmem:[#allocation5 + $0x3c] sm:$0xf]
        %v222 = vld [vmem:[#allocation5 + $0x40] sm:$0xf]
        %v223 = vld [vmem:[#allocation5 + $0x44] sm:$0xf]
        %v224 = vld [vmem:[#allocation5 + $0x48] sm:$0xf]
        %v225 = vld [vmem:[#allocation5 + $0x4c] sm:$0xf]
        %v226 = vld [vmem:[#allocation5 + $0x50] sm:$0xf]
        %v227 = vld [vmem:[#allocation5 + $0x54] sm:$0xf]
        %v228 = vld [vmem:[#allocation5 + $0x58] sm:$0xf]
        %v229 = vld [vmem:[#allocation5 + $0x5c] sm:$0xf]
        %v230 = vld [vmem:[#allocation5 + $0x60] sm:$0xf]
        %v231 = vld [vmem:[#allocation5 + $0x64] sm:$0xf]
        %v232 = vld [vmem:[#allocation5 + $0x68] sm:$0xf]
        %v233 = vld [vmem:[#allocation5 + $0x6c] sm:$0xf]
        %v234 = vld [vmem:[#allocation5 + $0x70] sm:$0xf]
        %v235 = vld [vmem:[#allocation5 + $0x74] sm:$0xf]
        %v236 = vld [vmem:[#allocation5 + $0x78] sm:$0xf]
        %v237 = vld [vmem:[#allocation5 + $0x7c] sm:$0xf]
        %v238 = vld [vmem:[#allocation5 + $0x80] sm:$0xf]
        %v239 = vld [vmem:[#allocation5 + $0x84] sm:$0xf]
        %v240 = vld [vmem:[#allocation5 + $0x88] sm:$0xf]
        %v241 = vld [vmem:[#allocation5 + $0x8c] sm:$0xf]
        %v242 = vld [vmem:[#allocation5 + $0x90] sm:$0xf]
        %v243 = vld [vmem:[#allocation5 + $0x94] sm:$0xf]
        %v244 = vld [vmem:[#allocation5 + $0x98] sm:$0xf]
        %v245 = vld [vmem:[#allocation5 + $0x9c] sm:$0xf]
        %v246 = vld [vmem:[#allocation5 + $0xa0] sm:$0xf]
        %v247 = vld [vmem:[#allocation5 + $0xa4] sm:$0xf]
        %v248 = vld [vmem:[#allocation5 + $0xa8] sm:$0xf]
        %v249 = vld [vmem:[#allocation5 + $0xac] sm:$0xf]
        %v250 = vld [vmem:[#allocation5 + $0xb0] sm:$0xf]
        %v251 = vld [vmem:[#allocation5 + $0xb4] sm:$0xf]
        %v252 = vld [vmem:[#allocation5 + $0xb8] sm:$0xf]
        %v253 = vld [vmem:[#allocation5 + $0xbc] sm:$0xf]
        %v254 = vld [vmem:[#allocation5 + $0xc0] sm:$0xf]
        %v255 = vld [vmem:[#allocation5 + $0xc4] sm:$0xf]
        %v256 = vld [vmem:[#allocation5 + $0xc8] sm:$0xf]
        %v257 = vld [vmem:[#allocation5 + $0xcc] sm:$0xf]
        %v258 = vld [vmem:[#allocation5 + $0xd0] sm:$0xf]
        %v259 = vld [vmem:[#allocation5 + $0xd4] sm:$0xf]
        %v260 = vld [vmem:[#allocation5 + $0xd8] sm:$0xf]
        %v261 = vld [vmem:[#allocation5 + $0xdc] sm:$0xf]
        %v262 = vld [vmem:[#allocation5 + $0xe0] sm:$0xf]
        %v263 = vld [vmem:[#allocation5 + $0xe4] sm:$0xf]
        %v264 = vld [vmem:[#allocation5 + $0xe8] sm:$0xf]
        %v265 = vld [vmem:[#allocation5 + $0xec] sm:$0xf]
        %v266 = vld [vmem:[#allocation5 + $0xf0] sm:$0xf]
        %v267 = vld [vmem:[#allocation5 + $0xf4] sm:$0xf]
        %v268 = vld [vmem:[#allocation5 + $0xf8] sm:$0xf]
        %v269 = vld [vmem:[#allocation5 + $0xfc] sm:$0xf]
        %v270 = vld [vmem:[#allocation5 + $0x100] sm:$0xf]
        %v271 = vld [vmem:[#allocation5 + $0x104] sm:$0xf]
        %v272 = vld [vmem:[#allocation5 + $0x108] sm:$0xf]
        %v273 = vld [vmem:[#allocation5 + $0x10c] sm:$0xf]
        %v274 = vld [vmem:[#allocation5 + $0x110] sm:$0xf]
        %v275 = vld [vmem:[#allocation5 + $0x114] sm:$0xf]
        %v276 = vld [vmem:[#allocation5 + $0x118] sm:$0xf]
        %v277 = vld [vmem:[#allocation5 + $0x11c] sm:$0xf]
        %v278 = vld [vmem:[#allocation5 + $0x120] sm:$0xf]
        %v279 = vld [vmem:[#allocation5 + $0x124] sm:$0xf]
        %v280 = vld [vmem:[#allocation5 + $0x128] sm:$0xf]
        %v281 = vld [vmem:[#allocation5 + $0x12c] sm:$0xf]
        %v282 = vld [vmem:[#allocation5 + $0x130] sm:$0xf]
        %v283 = vld [vmem:[#allocation5 + $0x134] sm:$0xf]
        %v284 = vld [vmem:[#allocation5 + $0x138] sm:$0xf]
        %v285 = vld [vmem:[#allocation5 + $0x13c] sm:$0xf]
        %v289 = vunpack.c.l.b16 %v203
        %v290 = vunpack.c.h.b16 %v203
        %v291 = vunpack.c.l.b16 %v204
        %v292 = vunpack.c.h.b16 %v204
        %v293 = vunpack.c.l.b16 %v205
        %v294 = vpack.c.b16 %v289, %v289
        %v295 = vpack.c.b16 %v290, %v290
        %v296 = vpack.c.b16 %v291, %v291
        %v297 = vpack.c.b16 %v292, %v292
        %v298 = vpack.c.b16 %v293, %v293
        %v384 = vunpack.c.l.b16 %v206
        %v385 = vunpack.c.l.b16 %v207
        %v386 = vunpack.c.l.b16 %v208
        %v387 = vunpack.c.l.b16 %v209
        %v388 = vunpack.c.l.b16 %v210
        %v389 = vunpack.c.l.b16 %v211
        %v390 = vunpack.c.l.b16 %v212
        %v391 = vunpack.c.l.b16 %v213
        %v392 = vunpack.c.l.b16 %v214
        %v393 = vunpack.c.l.b16 %v215
        %v394 = vunpack.c.l.b16 %v216
        %v395 = vunpack.c.l.b16 %v217
        %v396 = vunpack.c.l.b16 %v218
        %v397 = vunpack.c.l.b16 %v219
        %v398 = vunpack.c.l.b16 %v220
        %v399 = vunpack.c.l.b16 %v221
        %v400 = vunpack.c.l.b16 %v222
        %v401 = vunpack.c.l.b16 %v223
        %v402 = vunpack.c.l.b16 %v224
        %v403 = vunpack.c.l.b16 %v225
        %v404 = vunpack.c.l.b16 %v226
        %v405 = vunpack.c.l.b16 %v227
        %v406 = vunpack.c.l.b16 %v228
        %v407 = vunpack.c.l.b16 %v229
        %v408 = vunpack.c.l.b16 %v230
        %v409 = vunpack.c.l.b16 %v231
        %v410 = vunpack.c.l.b16 %v232
        %v411 = vunpack.c.l.b16 %v233
        %v412 = vunpack.c.l.b16 %v234
        %v413 = vunpack.c.l.b16 %v235
        %v414 = vunpack.c.l.b16 %v236
        %v415 = vunpack.c.l.b16 %v237
        %v416 = vunpack.c.l.b16 %v238
        %v417 = vunpack.c.l.b16 %v239
        %v418 = vunpack.c.l.b16 %v240
        %v419 = vunpack.c.l.b16 %v241
        %v420 = vunpack.c.l.b16 %v242
        %v421 = vunpack.c.l.b16 %v243
        %v422 = vunpack.c.l.b16 %v244
        %v423 = vunpack.c.l.b16 %v245
        %v424 = vunpack.c.l.b16 %v246
        %v425 = vunpack.c.l.b16 %v247
        %v426 = vunpack.c.l.b16 %v248
        %v427 = vunpack.c.l.b16 %v249
        %v428 = vunpack.c.l.b16 %v250
        %v429 = vunpack.c.l.b16 %v251
        %v430 = vunpack.c.l.b16 %v252
        %v431 = vunpack.c.l.b16 %v253
        %v432 = vunpack.c.l.b16 %v254
        %v433 = vunpack.c.l.b16 %v255
        %v434 = vunpack.c.l.b16 %v256
        %v435 = vunpack.c.l.b16 %v257
        %v436 = vunpack.c.l.b16 %v258
        %v437 = vunpack.c.l.b16 %v259
        %v438 = vunpack.c.l.b16 %v260
        %v439 = vunpack.c.l.b16 %v261
        %v440 = vunpack.c.l.b16 %v262
        %v441 = vunpack.c.l.b16 %v263
        %v442 = vunpack.c.l.b16 %v264
        %v443 = vunpack.c.l.b16 %v265
        %v444 = vunpack.c.l.b16 %v266
        %v445 = vunpack.c.l.b16 %v267
        %v446 = vunpack.c.l.b16 %v268
        %v447 = vunpack.c.l.b16 %v269
        %v448 = vunpack.c.l.b16 %v270
        %v449 = vunpack.c.l.b16 %v271
        %v450 = vunpack.c.l.b16 %v272
        %v451 = vunpack.c.l.b16 %v273
        %v452 = vunpack.c.l.b16 %v274
        %v453 = vunpack.c.l.b16 %v275
        %v454 = vunpack.c.l.b16 %v276
        %v455 = vunpack.c.l.b16 %v277
        %v456 = vunpack.c.l.b16 %v278
        %v457 = vunpack.c.l.b16 %v279
        %v458 = vunpack.c.l.b16 %v280
        %v459 = vunpack.c.l.b16 %v281
        %v460 = vunpack.c.l.b16 %v282
        %v461 = vunpack.c.l.b16 %v283
        %v462 = vunpack.c.l.b16 %v284
        %v463 = vunpack.c.l.b16 %v285
        %v464 = vpack.c.b16 %v385, %v384
        %v465 = vpack.c.b16 %v387, %v386
        %v466 = vpack.c.b16 %v389, %v388
        %v467 = vpack.c.b16 %v391, %v390
        %v468 = vpack.c.b16 %v393, %v392
        %v469 = vpack.c.b16 %v395, %v394
        %v470 = vpack.c.b16 %v397, %v396
        %v471 = vpack.c.b16 %v399, %v398
        %v472 = vpack.c.b16 %v401, %v400
        %v473 = vpack.c.b16 %v403, %v402
        %v474 = vpack.c.b16 %v405, %v404
        %v475 = vpack.c.b16 %v407, %v406
        %v476 = vpack.c.b16 %v409, %v408
        %v477 = vpack.c.b16 %v411, %v410
        %v478 = vpack.c.b16 %v413, %v412
        %v479 = vpack.c.b16 %v415, %v414
        %v480 = vpack.c.b16 %v417, %v416
        %v481 = vpack.c.b16 %v419, %v418
        %v482 = vpack.c.b16 %v421, %v420
        %v483 = vpack.c.b16 %v423, %v422
        %v484 = vpack.c.b16 %v425, %v424
        %v485 = vpack.c.b16 %v427, %v426
        %v486 = vpack.c.b16 %v429, %v428
        %v487 = vpack.c.b16 %v431, %v430
        %v488 = vpack.c.b16 %v433, %v432
        %v489 = vpack.c.b16 %v435, %v434
        %v490 = vpack.c.b16 %v437, %v436
        %v491 = vpack.c.b16 %v439, %v438
        %v492 = vpack.c.b16 %v441, %v440
        %v493 = vpack.c.b16 %v443, %v442
        %v494 = vpack.c.b16 %v445, %v444
        %v495 = vpack.c.b16 %v447, %v446
        %v496 = vpack.c.b16 %v449, %v448
        %v497 = vpack.c.b16 %v451, %v450
        %v498 = vpack.c.b16 %v453, %v452
        %v499 = vpack.c.b16 %v455, %v454
        %v500 = vpack.c.b16 %v457, %v456
        %v501 = vpack.c.b16 %v459, %v458
        %v502 = vpack.c.b16 %v461, %v460
        %v503 = vpack.c.b16 %v463, %v462
        %544 = vmatprep.subr.bf16.mxu0 0
        %545 = vmatpush1.bf16.msra.mxu0 %v471
        %546 = vmatprep.subr.bf16.mxu0 0
        %547 = vmatpush1.bf16.msra.mxu0 %v470
        %548 = vmatprep.subr.bf16.mxu0 0
        %549 = vmatpush1.bf16.msra.mxu0 %v469
        %550 = vmatprep.subr.bf16.mxu0 0
        %551 = vmatpush1.bf16.msra.mxu0 %v468
        %552 = vmatprep.subr.bf16.mxu0 0
        %553 = vmatpush1.bf16.msra.mxu0 %v467
        %554 = vmatprep.subr.bf16.mxu0 0
        %555 = vmatpush1.bf16.msra.mxu0 %v466
        %556 = vmatprep.subr.bf16.mxu0 0
        %557 = vmatpush1.bf16.msra.mxu0 %v465
        %558 = vmatprep.subr.bf16.mxu0 0
        %559 = vmatpush1.bf16.msra.mxu0 %v464
        %560 = vmatprep.subr.bf16.mxu0 0
        %561 = vmatpush2.bf16.msra.mxu0 %v479
        %562 = vmatprep.subr.bf16.mxu0 0
        %563 = vmatpush2.bf16.msra.mxu0 %v478
        %564 = vmatprep.subr.bf16.mxu0 0
        %565 = vmatpush2.bf16.msra.mxu0 %v477
        %566 = vmatprep.subr.bf16.mxu0 0
        %567 = vmatpush2.bf16.msra.mxu0 %v476
        %568 = vmatprep.subr.bf16.mxu0 0
        %569 = vmatpush2.bf16.msra.mxu0 %v475
        %570 = vmatprep.subr.bf16.mxu0 0
        %571 = vmatpush2.bf16.msra.mxu0 %v474
        %572 = vmatprep.subr.bf16.mxu0 0
        %573 = vmatpush2.bf16.msra.mxu0 %v473
        %574 = vmatprep.subr.bf16.mxu0 0
        %575 = vmatpush2.bf16.msra.mxu0 %v472
        %576 = vmatprep.mubr.bf16.mxu0 %v295
        %577 = vmatmul.mubr.bf16.gmra.mxu0 %v294
        %v578 = vpop.f32.mrf.mxu0
        %v579 = vadd.f32 0.0, %v578
        %v580 = vpop.f32.mrf.mxu0
        %v581 = vpop.f32.mrf.mxu0
        %v582 = vpop.f32.mrf.mxu0
        %583 = vdwg.mxu0
        %584 = vmatprep.subr.bf16.mxu0 0
        %585 = vmatpush1.bf16.msra.mxu0 %v487
        %586 = vmatprep.subr.bf16.mxu0 0
        %587 = vmatpush1.bf16.msra.mxu0 %v486
        %588 = vmatprep.subr.bf16.mxu0 0
        %589 = vmatpush1.bf16.msra.mxu0 %v485
        %590 = vmatprep.subr.bf16.mxu0 0
        %591 = vmatpush1.bf16.msra.mxu0 %v484
        %592 = vmatprep.subr.bf16.mxu0 0
        %593 = vmatpush1.bf16.msra.mxu0 %v483
        %594 = vmatprep.subr.bf16.mxu0 0
        %595 = vmatpush1.bf16.msra.mxu0 %v482
        %596 = vmatprep.subr.bf16.mxu0 0
        %597 = vmatpush1.bf16.msra.mxu0 %v481
        %598 = vmatprep.subr.bf16.mxu0 0
        %599 = vmatpush1.bf16.msra.mxu0 %v480
        %600 = vmatprep.subr.bf16.mxu0 0
        %601 = vmatpush2.bf16.msra.mxu0 %v495
        %602 = vmatprep.subr.bf16.mxu0 0
        %603 = vmatpush2.bf16.msra.mxu0 %v494
        %604 = vmatprep.subr.bf16.mxu0 0
        %605 = vmatpush2.bf16.msra.mxu0 %v493
        %606 = vmatprep.subr.bf16.mxu0 0
        %607 = vmatpush2.bf16.msra.mxu0 %v492
        %608 = vmatprep.subr.bf16.mxu0 0
        %609 = vmatpush2.bf16.msra.mxu0 %v491
        %610 = vmatprep.subr.bf16.mxu0 0
        %611 = vmatpush2.bf16.msra.mxu0 %v490
        %612 = vmatprep.subr.bf16.mxu0 0
        %613 = vmatpush2.bf16.msra.mxu0 %v489
        %614 = vmatprep.subr.bf16.mxu0 0
        %615 = vmatpush2.bf16.msra.mxu0 %v488
        %616 = vmatprep.mubr.bf16.mxu0 %v297
        %617 = vmatmul.mubr.bf16.gmra.mxu0 %v296
        %v618 = vpop.f32.mrf.mxu0
        %v619 = vadd.f32 %v579, %v618
        %v620 = vpop.f32.mrf.mxu0
        %v621 = vpop.f32.mrf.mxu0
        %v622 = vpop.f32.mrf.mxu0
        %623 = vdwg.mxu0
        %624 = vmatprep.subr.bf16.mxu0 0
        %625 = vmatpush1.bf16.msra.mxu0 %v503
        %626 = vmatprep.subr.bf16.mxu0 0
        %627 = vmatpush1.bf16.msra.mxu0 %v502
        %628 = vmatprep.subr.bf16.mxu0 0
        %629 = vmatpush1.bf16.msra.mxu0 %v501
        %630 = vmatprep.subr.bf16.mxu0 0
        %631 = vmatpush1.bf16.msra.mxu0 %v500
        %632 = vmatprep.subr.bf16.mxu0 0
        %633 = vmatpush1.bf16.msra.mxu0 %v499
        %634 = vmatprep.subr.bf16.mxu0 0
        %635 = vmatpush1.bf16.msra.mxu0 %v498
        %636 = vmatprep.subr.bf16.mxu0 0
        %637 = vmatpush1.bf16.msra.mxu0 %v497
        %638 = vmatprep.subr.bf16.mxu0 0
        %639 = vmatpush1.bf16.msra.mxu0 %v496
        %640 = vmatprep.subr.bf16.mxu0 0
        %641 = vmatpush2.bf16.msra.mxu0 0
        %642 = vmatprep.subr.bf16.mxu0 0
        %643 = vmatpush2.bf16.msra.mxu0 0
        %644 = vmatprep.subr.bf16.mxu0 0
        %645 = vmatpush2.bf16.msra.mxu0 0
        %646 = vmatprep.subr.bf16.mxu0 0
        %647 = vmatpush2.bf16.msra.mxu0 0
        %648 = vmatprep.subr.bf16.mxu0 0
        %649 = vmatpush2.bf16.msra.mxu0 0
        %650 = vmatprep.subr.bf16.mxu0 0
        %651 = vmatpush2.bf16.msra.mxu0 0
        %652 = vmatprep.subr.bf16.mxu0 0
        %653 = vmatpush2.bf16.msra.mxu0 0
        %654 = vmatprep.subr.bf16.mxu0 0
        %655 = vmatpush2.bf16.msra.mxu0 0
        %656 = vmatprep.mubr.bf16.mxu0 0
        %657 = vmatmul.mubr.bf16.gmra.mxu0 %v298
        %v658 = vpop.f32.mrf.mxu0
        %v659 = vadd.f32 %v619, %v658
        %v660 = vpop.f32.mrf.mxu0
        %v661 = vpop.f32.mrf.mxu0
        %v662 = vpop.f32.mrf.mxu0
        %663 = vdwg.mxu0
        %v664 = vmax.f32 %v659, 0.0
        %v665 = vpack.c.bf16 %v664, %v664
        %v666 = vld [vmem:[#allocation5 + $0x140] sm:$0xf]
        %v667 = vld [vmem:[#allocation5 + $0x144] sm:$0xf]
        %v668 = vld [vmem:[#allocation5 + $0x148] sm:$0xf]
        %v669 = vld [vmem:[#allocation5 + $0x14c] sm:$0xf]
        %v670 = vld [vmem:[#allocation5 + $0x150] sm:$0xf]
        %v671 = vld [vmem:[#allocation5 + $0x154] sm:$0xf]
        %v672 = vld [vmem:[#allocation5 + $0x158] sm:$0xf]
        %v673 = vld [vmem:[#allocation5 + $0x15c] sm:$0xf]
        %v674 = vld [vmem:[#allocation5 + $0x160] sm:$0xf]
        %v675 = vld [vmem:[#allocation5 + $0x164] sm:$0xf]
        %v676 = vld [vmem:[#allocation5 + $0x168] sm:$0xf]
        %v677 = vld [vmem:[#allocation5 + $0x16c] sm:$0xf]
        %v678 = vld [vmem:[#allocation5 + $0x170] sm:$0xf]
        %v679 = vld [vmem:[#allocation5 + $0x174] sm:$0xf]
        %v680 = vld [vmem:[#allocation5 + $0x178] sm:$0xf]
        %v681 = vld [vmem:[#allocation5 + $0x17c] sm:$0xf]
        %v682 = vld [vmem:[%s2] sm:$0x1]
        %v683 = vlaneseq
        %v684 = vshrl.u32 %v683, 7
        %v685 = vsub.s32 0, %v684
        %v686 = vrot.slane %v682, %v685
        %v703 = vunpack.c.l.b16 %v666
        %v704 = vunpack.c.l.b16 %v667
        %v705 = vunpack.c.l.b16 %v668
        %v706 = vunpack.c.l.b16 %v669
        %v707 = vunpack.c.l.b16 %v670
        %v708 = vunpack.c.l.b16 %v671
        %v709 = vunpack.c.l.b16 %v672
        %v710 = vunpack.c.l.b16 %v673
        %v711 = vunpack.c.l.b16 %v674
        %v712 = vunpack.c.l.b16 %v675
        %v713 = vunpack.c.l.b16 %v676
        %v714 = vunpack.c.l.b16 %v677
        %v715 = vunpack.c.l.b16 %v678
        %v716 = vunpack.c.l.b16 %v679
        %v717 = vunpack.c.l.b16 %v680
        %v718 = vunpack.c.l.b16 %v681
        %v719 = vpack.c.b16 %v704, %v703
        %v720 = vpack.c.b16 %v706, %v705
        %v721 = vpack.c.b16 %v708, %v707
        %v722 = vpack.c.b16 %v710, %v709
        %v723 = vpack.c.b16 %v712, %v711
        %v724 = vpack.c.b16 %v714, %v713
        %v725 = vpack.c.b16 %v716, %v715
        %v726 = vpack.c.b16 %v718, %v717
        %735 = vmatprep.subr.bf16.mxu0 0
        %736 = vmatpush1.bf16.msra.mxu0 %v726
        %737 = vmatprep.subr.bf16.mxu0 0
        %738 = vmatpush1.bf16.msra.mxu0 %v725
        %739 = vmatprep.subr.bf16.mxu0 0
        %740 = vmatpush1.bf16.msra.mxu0 %v724
        %741 = vmatprep.subr.bf16.mxu0 0
        %742 = vmatpush1.bf16.msra.mxu0 %v723
        %743 = vmatprep.subr.bf16.mxu0 0
        %744 = vmatpush1.bf16.msra.mxu0 %v722
        %745 = vmatprep.subr.bf16.mxu0 0
        %746 = vmatpush1.bf16.msra.mxu0 %v721
        %747 = vmatprep.subr.bf16.mxu0 0
        %748 = vmatpush1.bf16.msra.mxu0 %v720
        %749 = vmatprep.subr.bf16.mxu0 0
        %750 = vmatpush1.bf16.msra.mxu0 %v719
        %751 = vmatprep.subr.bf16.mxu0 0
        %752 = vmatpush2.bf16.msra.mxu0 0
        %753 = vmatprep.subr.bf16.mxu0 0
        %754 = vmatpush2.bf16.msra.mxu0 0
        %755 = vmatprep.subr.bf16.mxu0 0
        %756 = vmatpush2.bf16.msra.mxu0 0
        %757 = vmatprep.subr.bf16.mxu0 0
        %758 = vmatpush2.bf16.msra.mxu0 0
        %759 = vmatprep.subr.bf16.mxu0 0
        %760 = vmatpush2.bf16.msra.mxu0 0
        %761 = vmatprep.subr.bf16.mxu0 0
        %762 = vmatpush2.bf16.msra.mxu0 0
        %763 = vmatprep.subr.bf16.mxu0 0
        %764 = vmatpush2.bf16.msra.mxu0 0
        %765 = vmatprep.subr.bf16.mxu0 0
        %766 = vmatpush2.bf16.msra.mxu0 0
        %767 = vmatprep.mubr.bf16.mxu0 0
        %768 = vmatmul.mubr.bf16.gmra.mxu0 %v665
        %v769 = vpop.f32.mrf.mxu0
        %v770 = vadd.f32 %v686, %v769
        %v771 = vpop.f32.mrf.mxu0
        %v772 = vpop.f32.mrf.mxu0
        %v773 = vpop.f32.mrf.mxu0
        %774 = vdwg.mxu0
        %v775 = vmax.f32 %v770, 0.0
        %v776 = vpack.c.bf16 %v775, %v775
        %v777 = vld [vmem:[#allocation5 + $0x180] sm:$0xf]
        %v778 = vld [vmem:[#allocation5 + $0x184] sm:$0xf]
        %v779 = vld [vmem:[#allocation5 + $0x188] sm:$0xf]
        %v780 = vld [vmem:[#allocation5 + $0x18c] sm:$0xf]
        %v781 = vld [vmem:[#allocation5 + $0x190] sm:$0xf]
        %v782 = vld [vmem:[#allocation5 + $0x194] sm:$0xf]
        %v783 = vld [vmem:[#allocation5 + $0x198] sm:$0xf]
        %v784 = vld [vmem:[#allocation5 + $0x19c] sm:$0xf]
        %v785 = vld [vmem:[#allocation5 + $0x1a0] sm:$0xf]
        %v786 = vld [vmem:[#allocation5 + $0x1a4] sm:$0xf]
        %v787 = vld [vmem:[#allocation5 + $0x1a8] sm:$0xf]
        %v788 = vld [vmem:[#allocation5 + $0x1ac] sm:$0xf]
        %v789 = vld [vmem:[#allocation5 + $0x1b0] sm:$0xf]
        %v790 = vld [vmem:[#allocation5 + $0x1b4] sm:$0xf]
        %v791 = vld [vmem:[#allocation5 + $0x1b8] sm:$0xf]
        %v792 = vld [vmem:[#allocation5 + $0x1bc] sm:$0xf]
        %v793 = vld [vmem:[%s2 + $0x1] sm:$0x1]
        %v794 = vlaneseq
        %v795 = vshrl.u32 %v794, 7
        %v796 = vsub.s32 0, %v795
        %v797 = vrot.slane %v793, %v796
        %v814 = vunpack.c.l.b16 %v777
        %v815 = vunpack.c.l.b16 %v778
        %v816 = vunpack.c.l.b16 %v779
        %v817 = vunpack.c.l.b16 %v780
        %v818 = vunpack.c.l.b16 %v781
        %v819 = vunpack.c.l.b16 %v782
        %v820 = vunpack.c.l.b16 %v783
        %v821 = vunpack.c.l.b16 %v784
        %v822 = vunpack.c.l.b16 %v785
        %v823 = vunpack.c.l.b16 %v786
        %v824 = vunpack.c.l.b16 %v787
        %v825 = vunpack.c.l.b16 %v788
        %v826 = vunpack.c.l.b16 %v789
        %v827 = vunpack.c.l.b16 %v790
        %v828 = vunpack.c.l.b16 %v791
        %v829 = vunpack.c.l.b16 %v792
        %v830 = vpack.c.b16 %v815, %v814
        %v831 = vpack.c.b16 %v817, %v816
        %v832 = vpack.c.b16 %v819, %v818
        %v833 = vpack.c.b16 %v821, %v820
        %v834 = vpack.c.b16 %v823, %v822
        %v835 = vpack.c.b16 %v825, %v824
        %v836 = vpack.c.b16 %v827, %v826
        %v837 = vpack.c.b16 %v829, %v828
        %846 = vmatprep.subr.bf16.mxu0 0
        %847 = vmatpush1.bf16.msra.mxu0 %v837
        %848 = vmatprep.subr.bf16.mxu0 0
        %849 = vmatpush1.bf16.msra.mxu0 %v836
        %850 = vmatprep.subr.bf16.mxu0 0
        %851 = vmatpush1.bf16.msra.mxu0 %v835
        %852 = vmatprep.subr.bf16.mxu0 0
        %853 = vmatpush1.bf16.msra.mxu0 %v834
        %854 = vmatprep.subr.bf16.mxu0 0
        %855 = vmatpush1.bf16.msra.mxu0 %v833
        %856 = vmatprep.subr.bf16.mxu0 0
        %857 = vmatpush1.bf16.msra.mxu0 %v832
        %858 = vmatprep.subr.bf16.mxu0 0
        %859 = vmatpush1.bf16.msra.mxu0 %v831
        %860 = vmatprep.subr.bf16.mxu0 0
        %861 = vmatpush1.bf16.msra.mxu0 %v830
        %862 = vmatprep.subr.bf16.mxu0 0
        %863 = vmatpush2.bf16.msra.mxu0 0
        %864 = vmatprep.subr.bf16.mxu0 0
        %865 = vmatpush2.bf16.msra.mxu0 0
        %866 = vmatprep.subr.bf16.mxu0 0
        %867 = vmatpush2.bf16.msra.mxu0 0
        %868 = vmatprep.subr.bf16.mxu0 0
        %869 = vmatpush2.bf16.msra.mxu0 0
        %870 = vmatprep.subr.bf16.mxu0 0
        %871 = vmatpush2.bf16.msra.mxu0 0
        %872 = vmatprep.subr.bf16.mxu0 0
        %873 = vmatpush2.bf16.msra.mxu0 0
        %874 = vmatprep.subr.bf16.mxu0 0
        %875 = vmatpush2.bf16.msra.mxu0 0
        %876 = vmatprep.subr.bf16.mxu0 0
        %877 = vmatpush2.bf16.msra.mxu0 0
        %878 = vmatprep.mubr.bf16.mxu0 0
        %879 = vmatmul.mubr.bf16.gmra.mxu0 %v776
        %v880 = vpop.f32.mrf.mxu0
        %v881 = vadd.f32 %v797, %v880
        %v882 = vpop.f32.mrf.mxu0
        %v883 = vpop.f32.mrf.mxu0
        %v884 = vpop.f32.mrf.mxu0
        %885 = vdwg.mxu0
        %886 = vst [vmem:[%s201] sm:$0xff] %v881
        %s887 = sand.u32 %s97, 1
        %s888 = scalar_lea.sflag [#allocation4], %s887
        %s889 = sand.u32 %s97, 1
        %s890 = smul.addr %s889, 8
        %s891 = scalar_lea.vmem [#allocation7], %s890
        // Predicated region
        $region41: #{tpu_custom_call.1} parent=31 // pred_check
          %p892 = pneg %p107
        $region42: #{tpu_custom_call.1} parent=31 // pred_check_branch
          %894 = sbr.rel (%p892) target = $region44
        $region43: #{tpu_custom_call.1} parent=31 // pred_region
          %s896 = ssub.s32 128, 128
          %897 = vsyncadd %s888, %s896
          %s898 = smul.addr %s21, 128
          %s899 = scalar_lea.hbm %s3, %s898
          %s901 = sshll.u32 %s891, 4
          %s902 = int_to_ptr.vmem [resolvable:$true] %s901
          %904 = dma.vmem_to_hbm [thread:$0]  %s902, 128, %s899, %s888
        $region44: #{tpu_custom_call.1} parent=31 // pred_fallthru
          _
      $region32: #{tpu_custom_call.1} parent=5 // pred_fallthru
        _
      %p905 = scmp.le.s32.totalorder 2, %s16
      // Predicated region
      $region45: #{tpu_custom_call.1} parent=5 // pred_check
        %p906 = pneg %p905
      $region46: #{tpu_custom_call.1} parent=5 // pred_check_branch
        %908 = sbr.rel (%p906) target = $region48
      $region47: #{tpu_custom_call.1} parent=5 // pred_region
        %s909 = ssub.s32 %s16, 2
        // Predicated region
        $region49: #{tpu_custom_call.1} parent=47 // pred_check
          %p910 = pneg %p113
        $region50: #{tpu_custom_call.1} parent=47 // pred_check_branch
          %912 = sbr.rel (%p910) target = $region52
        $region51: #{tpu_custom_call.1} parent=47 // pred_region
          %s913 = sand.u32 %s98, 1
          %s914 = scalar_lea.sflag [#allocation4], %s913
          %s915 = sand.u32 %s98, 1
          %s916 = smul.addr %s915, 8
          %s917 = scalar_lea.vmem [#allocation7], %s916
          %918 = dma.done %s914, 128
        $region52: #{tpu_custom_call.1} parent=47 // pred_fallthru
          _
      $region48: #{tpu_custom_call.1} parent=5 // pred_fallthru
        _
    $region6: #{tpu_custom_call.1} parent=1 // loop_footer
      %s20 = sadd.s32 1, %s16
    $region7: #{tpu_custom_call.1} parent=1 // loop_footer_branch
      %15 = sbr.rel target = $region3
    $region8: #{tpu_custom_call.1} parent=1 // loop_exit
      _
    %919 = vsyncpa [#allocation3], 1
    %s920 = scalar_lea.sflag [#allocation3], 1
    %921 = vsyncpa %s920, 1
    %922 = vsyncpa [#allocation6], 1
    %923 = vsyncpa [#allocation4], 1
    %s924 = scalar_lea.sflag [#allocation4], 1
    %925 = vsyncpa %s924, 1

</llo_original>
